<compile_context>
chip_gen: v6e
topology: v6e:2x2x1
jax: 0.10.0
libtpu: 0.0.40
codegen_flags: <defaults>
</compile_context>

<pallas_src>
import functools

import jax
import jax.numpy as jnp
from jax.experimental import pallas as pl
from jax.experimental.pallas import tpu as pltpu

LANES = 128


def _iou_loss_kernel(score_ref, label_ref, mis_ref, val_ref, acc_mis, acc_val,
                     *, ignore_label, num_channels, rows_total, block_rows,
                     blocks_per_chunk, full_blocks, mask_needed):
    """Count (# valid & mispredicted, # valid) for one (batch, chunk) slot."""
    cc = pl.program_id(1)
    b = pl.program_id(2)

    @pl.when(b == 0)
    def _():
        acc_mis[...] = jnp.zeros_like(acc_mis)
        acc_val[...] = jnp.zeros_like(acc_val)

    # Label arrives in its native (possibly narrow) int dtype; widen in-register.
    lab = label_ref[0].astype(jnp.int32)               # (block_rows, L)

    # Running argmax over channels (static unrolled loop; strict '>' keeps the
    # first maximum, matching jnp.argmax tie-breaking).  Pure (block_rows, L)
    # VPU compares/selects on dense vregs.
    # TODO(synk): if bundle dumps ever show vst-slot saturation for large C,
    # tile this over 8-sublane strips with an unrolled fori_loop.
    best = score_ref[0, 0]
    pred = jnp.zeros(lab.shape, jnp.int32)
    for ch in range(1, num_channels):
        v = score_ref[0, ch]
        take = v > best
        best = jnp.where(take, v, best)
        pred = jnp.where(take, ch, pred)

    not_ignored = lab != ignore_label
    mismatch = pred != lab

    def _accumulate(extra_mask=None):
        valid = not_ignored if extra_mask is None else jnp.logical_and(
            not_ignored, extra_mask)
        mism = jnp.logical_and(valid, mismatch)
        # In-register reduce down to one (1, L) vreg partial; the scratch
        # accumulators stay a single vreg each (no block-sized RMW traffic).
        acc_val[...] += jnp.sum(valid.astype(jnp.int32), axis=0, keepdims=True)
        acc_mis[...] += jnp.sum(mism.astype(jnp.int32), axis=0, keepdims=True)

    if mask_needed:
        gb = cc * blocks_per_chunk + b                  # global spatial block

        @pl.when(gb < full_blocks)                      # fully in-bounds block
        def _():
            _accumulate()

        @pl.when(gb >= full_blocks)                     # partial/phantom block
        def _():
            row = gb * block_rows + jax.lax.broadcasted_iota(
                jnp.int32, lab.shape, 0)
            _accumulate(row < rows_total)
    else:
        _accumulate()

    @pl.when(b == pl.num_programs(2) - 1)
    def _():
        mis_ref[...] = acc_mis[...].reshape(mis_ref.shape)
        val_ref[...] = acc_val[...].reshape(val_ref.shape)


def _sublane_multiple(itemsize):
    # second-minor block dim must respect dtype packing: f32->8, 16-bit->16, 8-bit->32
    return 8 * max(1, 4 // max(1, int(itemsize)))


def _vmem_budget_bytes():
    mib = 1024 * 1024
    cap = None
    try:
        cap = getattr(pltpu.get_tpu_info(), "vmem_capacity_bytes", None)
    except Exception:
        cap = None
    if not cap:
        cap = 64 * mib                  # conservative default
    if cap >= 96 * mib:                 # v5e / v6e class (128 MiB VMEM)
        return 64 * mib
    if cap >= 48 * mib:                 # v7x class (64 MiB VMEM per TC)
        return 40 * mib
    return max(8 * mib, cap // 2)


@functools.partial(jax.jit, static_argnames=("ignore_label",))
def iou_loss(score, label, ignore_label=-1):
    """Pallas implementation of IoUloss.forward."""
    n, c, ph, pw = score.shape
    ln, h, w = label.shape
    assert ln == n, "batch mismatch between score and label"

    if (ph, pw) != (h, w):
        # F.upsample(mode='bilinear', align_corners=False) == half-pixel bilinear.
        # TODO(synk): fuse the bilinear upsample into the kernel (DMA the two
        # contributing low-res rows per output row, interpolate in VMEM) to
        # avoid materializing the full-size resized tensor in HBM.
        score = jax.image.resize(score, (n, c, h, w), method="bilinear")

    # Keep label narrow: only widen if it is not a signed int of <= 32 bits.
    if not (jnp.issubdtype(label.dtype, jnp.signedinteger)
            and label.dtype.itemsize <= 4):
        label = label.astype(jnp.int32)

    hw = h * w
    if hw % LANES == 0:
        rows, lanes = hw // LANES, LANES                # free reshape, lane-dense
        score_v = score.reshape(n, c, rows, lanes)
        label_v = label.reshape(n, rows, lanes)
    else:
        rows, lanes = h, w                              # 4D view, no pad copy
        score_v = score
        label_v = label

    s_item = score_v.dtype.itemsize
    l_item = label_v.dtype.itemsize

    # block_rows: target ~8 MiB of score per grid step, capped by the
    # per-generation VMEM budget (2x double-buffered score + label blocks plus
    # ~8 block-sized f32/int32 compiler temps for best/pred/take/valid/mism).
    budget = _vmem_budget_bytes()
    per_row = lanes * (2 * c * s_item + 2 * l_item + 8 * 4)
    cap_rows = max(1, budget // per_row)
    tgt_rows = max(1, (8 * 1024 * 1024) // max(1, c * lanes * s_item))
    min_r = max(_sublane_multiple(s_item), _sublane_multiple(l_item))
    br = min(cap_rows, tgt_rows)
    br = max(min_r, (br // min_r) * min_r)
    block_rows = rows if br >= rows else br

    total_blocks = -(-rows // block_rows)
    full_blocks = rows // block_rows
    # Split the spatial axis across cores only when the batch axis cannot
    # (v7x has 2 TensorCores; harmless on single-core v5e/v6e).
    n_chunks = 2 if (n == 1 and total_blocks >= 2) else 1
    bpc = -(-total_blocks // n_chunks)
    mask_needed = (n_chunks * bpc * block_rows) != rows
    needs_clamp = (n_chunks * bpc) != total_blocks

    if needs_clamp:
        def _gb(cc, b):
            # phantom trailing blocks of the last chunk re-read the last real
            # block; the in-kernel row mask zeroes their contribution.
            return jnp.minimum(cc * bpc + b, total_blocks - 1)
    else:
        def _gb(cc, b):
            return cc * bpc + b

    kernel = functools.partial(
        _iou_loss_kernel,
        ignore_label=ignore_label,
        num_channels=c,
        rows_total=rows,
        block_rows=block_rows,
        blocks_per_chunk=bpc,
        full_blocks=full_blocks,
        mask_needed=mask_needed,
    )

    mis, val = pl.pallas_call(
        kernel,
        out_shape=(
            jax.ShapeDtypeStruct((n, n_chunks, 1, lanes), jnp.int32),
            jax.ShapeDtypeStruct((n, n_chunks, 1, lanes), jnp.int32),
        ),
        grid_spec=pltpu.PrefetchScalarGridSpec(
            num_scalar_prefetch=0,
            grid=(n, n_chunks, bpc),
            in_specs=[
                pl.BlockSpec((1, c, block_rows, lanes),
                             lambda i, cc, b: (i, 0, _gb(cc, b), 0)),
                pl.BlockSpec((1, block_rows, lanes),
                             lambda i, cc, b: (i, _gb(cc, b), 0)),
            ],
            out_specs=(
                pl.BlockSpec((1, 1, 1, lanes), lambda i, cc, b: (i, cc, 0, 0)),
                pl.BlockSpec((1, 1, 1, lanes), lambda i, cc, b: (i, cc, 0, 0)),
            ),
            scratch_shapes=[
                pltpu.VMEM((1, lanes), jnp.int32),
                pltpu.VMEM((1, lanes), jnp.int32),
            ],
        ),
        compiler_params=pltpu.CompilerParams(
            dimension_semantics=("parallel", "parallel", "arbitrary"),
            vmem_limit_bytes=budget,
        ),
    )(score_v, label_v)

    n_mis = jnp.sum(mis).astype(jnp.float32)
    n_valid = jnp.sum(val).astype(jnp.float32)
    return n_mis / n_valid


def _reference(score, label, ignore_label=-1):
    n, c, ph, pw = score.shape
    _, h, w = label.shape
    if (ph, pw) != (h, w):
        score = jax.image.resize(score, (n, c, h, w), method="bilinear")
    pred = jnp.argmax(score, axis=1)
    valid = label != ignore_label
    mism = jnp.logical_and(valid, pred != label)
    return jnp.sum(mism).astype(jnp.float32) / jnp.sum(valid).astype(jnp.float32)


if __name__ == "__main__":
    key = jax.random.PRNGKey(0)
    k_score, k_label, k_small = jax.random.split(key, 3)

    N, C, H, W = 2, 4, 16, 16
    score = jax.random.uniform(k_score, (N, C, H, W), dtype=jnp.float32)
    # labels in {-1, 0, .., C-1}; -1 is the ignore label
    label = jax.random.randint(k_label, (N, H, W), minval=-1, maxval=C,
                               dtype=jnp.int32)

    out = jax.block_until_ready(iou_loss(score, label, ignore_label=-1))
    ref = jax.block_until_ready(_reference(score, label, ignore_label=-1))
    assert jnp.allclose(out, ref, rtol=1e-6, atol=1e-6), (out, ref)

    # bilinear-upsample path: score at half resolution, resized to label size
    score_small = jax.random.uniform(k_small, (N, C, 8, 8), dtype=jnp.float32)
    out2 = jax.block_until_ready(iou_loss(score_small, label, ignore_label=-1))
    ref2 = jax.block_until_ready(_reference(score_small, label, ignore_label=-1))
    assert jnp.allclose(out2, ref2, rtol=1e-6, atol=1e-6), (out2, ref2)

    print("KERNEL_OK")
</pallas_src>

<mosaic_0001>
module attributes {stable_mosaic.version = 11 : i64} {
  func.func @_iou_loss_kernel(%arg0: i32, %arg1: i32, %arg2: i32, %arg3: memref<1x4x2x128xf32, #tpu.memory_space<vmem>>, %arg4: memref<1x2x128xi32, #tpu.memory_space<vmem>>, %arg5: memref<1x1x1x128xi32, #tpu.memory_space<vmem>>, %arg6: memref<1x1x1x128xi32, #tpu.memory_space<vmem>>, %arg7: memref<1x128xi32, #tpu.memory_space<vmem>>, %arg8: memref<1x128xi32, #tpu.memory_space<vmem>>) attributes {dimension_semantics = [#tpu.dimension_semantics<parallel>, #tpu.dimension_semantics<parallel>, #tpu.dimension_semantics<arbitrary>], iteration_bounds = array<i64: 2, 1, 1>, scalar_prefetch = 0 : i64, scratch_operands = 2 : i64, tpu.core_type = #tpu.core_type<tc>, window_params = [{transform_indices = @transform_0, window_bounds = array<i64: 1, 4, 2, 128>}, {transform_indices = @transform_1, window_bounds = array<i64: 1, 2, 128>}, {transform_indices = @transform_2, window_bounds = array<i64: 1, 1, 1, 128>}, {transform_indices = @transform_3, window_bounds = array<i64: 1, 1, 1, 128>}]} {
    %c0_i32 = arith.constant 0 : i32
    %0 = arith.cmpi eq, %arg2, %c0_i32 : i32
    %1 = arith.extui %0 : i1 to i32
    %c0_i32_0 = arith.constant 0 : i32
    %2 = arith.cmpi ne, %1, %c0_i32_0 : i32
    scf.if %2 {
      %c0_i32_28 = arith.constant 0 : i32
      %44 = vector.broadcast %c0_i32_28 : i32 to vector<1x128xi32>
      %c0_29 = arith.constant 0 : index
      %c0_30 = arith.constant 0 : index
      %45 = vector.load %arg7[%c0_29, %c0_30] : memref<1x128xi32, #tpu.memory_space<vmem>>, vector<1x128xi32>
      tpu.vector_store %arg7[%c0_29, %c0_30], %44 {strides = array<i32>} : memref<1x128xi32, #tpu.memory_space<vmem>>, vector<1x128xi32>,
      %c0_i32_31 = arith.constant 0 : i32
      %46 = vector.broadcast %c0_i32_31 : i32 to vector<1x128xi32>
      %c0_32 = arith.constant 0 : index
      %c0_33 = arith.constant 0 : index
      %47 = vector.load %arg8[%c0_32, %c0_33] : memref<1x128xi32, #tpu.memory_space<vmem>>, vector<1x128xi32>
      tpu.vector_store %arg8[%c0_32, %c0_33], %46 {strides = array<i32>} : memref<1x128xi32, #tpu.memory_space<vmem>>, vector<1x128xi32>,
    } else {
    }
    %c0 = arith.constant 0 : index
    %c0_1 = arith.constant 0 : index
    %c0_2 = arith.constant 0 : index
    %3 = vector.load %arg4[%c0, %c0_1, %c0_2] : memref<1x2x128xi32, #tpu.memory_space<vmem>>, vector<1x2x128xi32>
    %4 = vector.shape_cast %3 : vector<1x2x128xi32> to vector<2x128xi32>
    %c0_3 = arith.constant 0 : index
    %c0_4 = arith.constant 0 : index
    %c0_5 = arith.constant 0 : index
    %c0_6 = arith.constant 0 : index
    %5 = vector.load %arg3[%c0_3, %c0_4, %c0_5, %c0_6] : memref<1x4x2x128xf32, #tpu.memory_space<vmem>>, vector<1x1x2x128xf32>
    %6 = vector.shape_cast %5 : vector<1x1x2x128xf32> to vector<2x128xf32>
    %c0_i32_7 = arith.constant 0 : i32
    %7 = vector.broadcast %c0_i32_7 : i32 to vector<2x128xi32>
    %c0_8 = arith.constant 0 : index
    %c1 = arith.constant 1 : index
    %c0_9 = arith.constant 0 : index
    %c0_10 = arith.constant 0 : index
    %8 = vector.load %arg3[%c0_8, %c1, %c0_9, %c0_10] : memref<1x4x2x128xf32, #tpu.memory_space<vmem>>, vector<1x1x2x128xf32>
    %9 = vector.shape_cast %8 : vector<1x1x2x128xf32> to vector<2x128xf32>
    %10 = arith.cmpf ogt, %9, %6 : vector<2x128xf32>
    %11 = arith.select %10, %9, %6 : vector<2x128xi1>, vector<2x128xf32>
    %c1_i32 = arith.constant 1 : i32
    %12 = vector.broadcast %c1_i32 : i32 to vector<2x128xi32>
    %13 = arith.select %10, %12, %7 : vector<2x128xi1>, vector<2x128xi32>
    %c0_11 = arith.constant 0 : index
    %c2 = arith.constant 2 : index
    %c0_12 = arith.constant 0 : index
    %c0_13 = arith.constant 0 : index
    %14 = vector.load %arg3[%c0_11, %c2, %c0_12, %c0_13] : memref<1x4x2x128xf32, #tpu.memory_space<vmem>>, vector<1x1x2x128xf32>
    %15 = vector.shape_cast %14 : vector<1x1x2x128xf32> to vector<2x128xf32>
    %16 = arith.cmpf ogt, %15, %11 : vector<2x128xf32>
    %17 = arith.select %16, %15, %11 : vector<2x128xi1>, vector<2x128xf32>
    %c2_i32 = arith.constant 2 : i32
    %18 = vector.broadcast %c2_i32 : i32 to vector<2x128xi32>
    %19 = arith.select %16, %18, %13 : vector<2x128xi1>, vector<2x128xi32>
    %c0_14 = arith.constant 0 : index
    %c3 = arith.constant 3 : index
    %c0_15 = arith.constant 0 : index
    %c0_16 = arith.constant 0 : index
    %20 = vector.load %arg3[%c0_14, %c3, %c0_15, %c0_16] : memref<1x4x2x128xf32, #tpu.memory_space<vmem>>, vector<1x1x2x128xf32>
    %21 = vector.shape_cast %20 : vector<1x1x2x128xf32> to vector<2x128xf32>
    %22 = arith.cmpf ogt, %21, %17 : vector<2x128xf32>
    %c3_i32 = arith.constant 3 : i32
    %23 = vector.broadcast %c3_i32 : i32 to vector<2x128xi32>
    %24 = arith.select %22, %23, %19 : vector<2x128xi1>, vector<2x128xi32>
    %c-1_i32 = arith.constant -1 : i32
    %25 = vector.broadcast %c-1_i32 : i32 to vector<2x128xi32>
    %26 = arith.cmpi ne, %4, %25 : vector<2x128xi32>
    %27 = arith.cmpi ne, %24, %4 : vector<2x128xi32>
    %28 = arith.andi %26, %27 : vector<2x128xi1>
    %c0_17 = arith.constant 0 : index
    %c0_18 = arith.constant 0 : index
    %29 = vector.load %arg8[%c0_17, %c0_18] : memref<1x128xi32, #tpu.memory_space<vmem>>, vector<1x128xi32>
    %30 = arith.extui %26 : vector<2x128xi1> to vector<2x128xi32>
    %cst = arith.constant dense<0> : vector<128xi32>
    %31 = vector.multi_reduction <add>, %30, %cst [0] : vector<2x128xi32> to vector<128xi32>
    %32 = vector.shape_cast %31 : vector<128xi32> to vector<1x128xi32>
    %33 = arith.addi %29, %32 : vector<1x128xi32>
    %c0_19 = arith.constant 0 : index
    %c0_20 = arith.constant 0 : index
    %34 = vector.load %arg8[%c0_19, %c0_20] : memref<1x128xi32, #tpu.memory_space<vmem>>, vector<1x128xi32>
    tpu.vector_store %arg8[%c0_19, %c0_20], %33 {strides = array<i32>} : memref<1x128xi32, #tpu.memory_space<vmem>>, vector<1x128xi32>,
    %c0_21 = arith.constant 0 : index
    %c0_22 = arith.constant 0 : index
    %35 = vector.load %arg7[%c0_21, %c0_22] : memref<1x128xi32, #tpu.memory_space<vmem>>, vector<1x128xi32>
    %36 = arith.extui %28 : vector<2x128xi1> to vector<2x128xi32>
    %cst_23 = arith.constant dense<0> : vector<128xi32>
    %37 = vector.multi_reduction <add>, %36, %cst_23 [0] : vector<2x128xi32> to vector<128xi32>
    %38 = vector.shape_cast %37 : vector<128xi32> to vector<1x128xi32>
    %39 = arith.addi %35, %38 : vector<1x128xi32>
    %c0_24 = arith.constant 0 : index
    %c0_25 = arith.constant 0 : index
    %40 = vector.load %arg7[%c0_24, %c0_25] : memref<1x128xi32, #tpu.memory_space<vmem>>, vector<1x128xi32>
    tpu.vector_store %arg7[%c0_24, %c0_25], %39 {strides = array<i32>} : memref<1x128xi32, #tpu.memory_space<vmem>>, vector<1x128xi32>,
    %c0_i32_26 = arith.constant 0 : i32
    %41 = arith.cmpi eq, %arg2, %c0_i32_26 : i32
    %42 = arith.extui %41 : i1 to i32
    %c0_i32_27 = arith.constant 0 : i32
    %43 = arith.cmpi ne, %42, %c0_i32_27 : i32
    scf.if %43 {
      %c0_28 = arith.constant 0 : index
      %c0_29 = arith.constant 0 : index
      %44 = vector.load %arg7[%c0_28, %c0_29] : memref<1x128xi32, #tpu.memory_space<vmem>>, vector<1x128xi32>
      %45 = vector.shape_cast %44 : vector<1x128xi32> to vector<1x1x1x128xi32>
      %c0_30 = arith.constant 0 : index
      %c0_31 = arith.constant 0 : index
      %c0_32 = arith.constant 0 : index
      %c0_33 = arith.constant 0 : index
      %46 = vector.load %arg5[%c0_30, %c0_31, %c0_32, %c0_33] : memref<1x1x1x128xi32, #tpu.memory_space<vmem>>, vector<1x1x1x128xi32>
      tpu.vector_store %arg5[%c0_30, %c0_31, %c0_32, %c0_33], %45 {strides = array<i32>} : memref<1x1x1x128xi32, #tpu.memory_space<vmem>>, vector<1x1x1x128xi32>,
      %c0_34 = arith.constant 0 : index
      %c0_35 = arith.constant 0 : index
      %47 = vector.load %arg8[%c0_34, %c0_35] : memref<1x128xi32, #tpu.memory_space<vmem>>, vector<1x128xi32>
      %48 = vector.shape_cast %47 : vector<1x128xi32> to vector<1x1x1x128xi32>
      %c0_36 = arith.constant 0 : index
      %c0_37 = arith.constant 0 : index
      %c0_38 = arith.constant 0 : index
      %c0_39 = arith.constant 0 : index
      %49 = vector.load %arg6[%c0_36, %c0_37, %c0_38, %c0_39] : memref<1x1x1x128xi32, #tpu.memory_space<vmem>>, vector<1x1x1x128xi32>
      tpu.vector_store %arg6[%c0_36, %c0_37, %c0_38, %c0_39], %48 {strides = array<i32>} : memref<1x1x1x128xi32, #tpu.memory_space<vmem>>, vector<1x1x1x128xi32>,
    } else {
    }
    return
  }
  func.func @transform_0(%arg0: i32, %arg1: i32, %arg2: i32) -> (i32, i32, i32, i32) {
    %c1_i32 = arith.constant 1 : i32
    %0 = arith.muli %arg1, %c1_i32 : i32
    %1 = arith.addi %0, %arg2 : i32
    %c0_i32 = arith.constant 0 : i32
    %c0_i32_0 = arith.constant 0 : i32
    %c0_i32_1 = arith.constant 0 : i32
    return %arg0, %c0_i32, %1, %c0_i32_0 : i32, i32, i32, i32
  }
  func.func @transform_1(%arg0: i32, %arg1: i32, %arg2: i32) -> (i32, i32, i32) {
    %c1_i32 = arith.constant 1 : i32
    %0 = arith.muli %arg1, %c1_i32 : i32
    %1 = arith.addi %0, %arg2 : i32
    %c0_i32 = arith.constant 0 : i32
    %c0_i32_0 = arith.constant 0 : i32
    return %arg0, %1, %c0_i32 : i32, i32, i32
  }
  func.func @transform_2(%arg0: i32, %arg1: i32, %arg2: i32) -> (i32, i32, i32, i32) {
    %c0_i32 = arith.constant 0 : i32
    %c0_i32_0 = arith.constant 0 : i32
    %c0_i32_1 = arith.constant 0 : i32
    return %arg0, %arg1, %c0_i32, %c0_i32_0 : i32, i32, i32, i32
  }
  func.func @transform_3(%arg0: i32, %arg1: i32, %arg2: i32) -> (i32, i32, i32, i32) {
    %c0_i32 = arith.constant 0 : i32
    %c0_i32_0 = arith.constant 0 : i32
    %c0_i32_1 = arith.constant 0 : i32
    return %arg0, %arg1, %c0_i32, %c0_i32_0 : i32, i32, i32, i32
  }
}

</mosaic_0001>

<llo_original>
// kernel: iou_loss.1
$region0: #{iou_loss.1}
  #allocation0 [shape = 'u32[]', space=smem, size = 0x4, offset = 0x4, fixed_abs, tag = 'smem constant byte address 0x4 - core index']
  #allocation1 [shape = 'u32[144,128]{1,0:T(1,128)}', space=vmem, size = 0x12000, scoped, tag = 'internal scratch']
  #allocation2 [shape = 's32[1,128]{1,0:T(1,128)}', space=vmem, size = 0x200, scoped, tag = 'scratch operand']
  #allocation3 [shape = 's32[1,128]{1,0:T(1,128)}', space=vmem, size = 0x200, scoped, tag = 'scratch operand']
  %s0 = inlined_call_operand.vmem [shape: f32[2,4,2,128], index: 0, kind: input, shape index: {}]
  %s1 = inlined_call_operand.vmem [shape: s32[2,2,128], index: 1, kind: input, shape index: {}]
  %s2 = inlined_call_operand.vmem [shape: s32[2,1,1,128], index: 2, kind: output, shape index: {0}]
  %s3 = inlined_call_operand.vmem [shape: s32[2,1,1,128], index: 3, kind: output, shape index: {1}]
  %4 = xla_tuple %s2, %s3
  %s5 = sld [smem:[#allocation0]]
  $region57: #{iou_loss.1} parent=0
    _
  %s7 = ssub.s32 1, %s5
  %s8 = scalar_select 0, %s7, %s5
  loop: start=0, step=1, limit=4
  $region2: #{iou_loss.1} parent=0 // loop_pre_header
    _
  $region3: #{iou_loss.1} parent=0 // loop_header
    %s10 = sphi 0, %s14
    %p11 = scmp.ge.s32.totalorder %s10, 4
    %s17 = sphi 0, %s36
    %s18 = sphi 0, %s32
    %s19 = sphi 0, %s28
    %s20 = sphi 0, %s17
    %s21 = sphi 0, %s18
    %s22 = sphi 0, %s19
    %s23 = sphi 0, %s20
    %s24 = sphi 0, %s21
    %s25 = sphi 0, %s22
    %s43 = sphi 0, %s45
    %s46 = sphi 0, %s43
    %s47 = sphi 0, %s46
    %s63 = sphi 0, %s47
    %s73 = sphi 0, %s75
    %s76 = sphi 0, %s73
    %s77 = sphi 0, %s76
    %s93 = sphi 0, %s77
    %s101 = sphi 0, %s103
    %s104 = sphi 0, %s101
    %s105 = sphi 0, %s104
    %s121 = sphi 0, %s105
    %s129 = sphi 0, %s131
    %s132 = sphi 0, %s129
    %s133 = sphi 0, %s132
    %s149 = sphi 0, %s133
  $region4: #{iou_loss.1} parent=0 // loop_header_branch
    %13 = sbr.rel (%p11) target = $region8
  $region5: #{iou_loss.1} parent=0 // loop_body
    %s15 = ssub.s32 %s10, 1
    %s16 = ssub.s32 %s10, 2
    %s26 = sadd.s32 1, %s19
    %p27 = scmp.ge.s32.totalorder %s26, 1
    %s28 = scalar_select %p27, 0, %s26
    %s29 = sadd.s32 1, %s18
    %s30 = scalar_select %p27, %s29, %s18
    %p31 = scmp.ge.s32.totalorder %s30, 1
    %s32 = scalar_select %p31, 0, %s30
    %s33 = sadd.s32 1, %s17
    %s34 = scalar_select %p31, %s33, %s17
    %p35 = scmp.ge.s32.totalorder %s34, 2
    %s36 = scalar_select %p35, 0, %s34
    %s37 = sadd.s32 %s18, %s19
    %s38 = sadd.s32 %s32, %s28
    %s39 = ssub.s32 %s17, %s36
    %s40 = ssub.s32 %s37, %s38
    %s41 = sor.u32 %s39, %s40
    %p42 = scmp.eq.s32.totalorder %s41, 0
    %s44 = sadd.s32 %s43, 1
    %s45 = scalar_select %p42, %s43, %s44
    %p48 = pneg %p42
    %p49 = scmp.eq.s32.totalorder %s10, 1
    %p50 = por %p48, %p49
    %p51 = scmp.ne.s32.totalorder %s43, %s46
    %p52 = scmp.eq.s32.totalorder %s10, 0
    %p53 = por %p51, %p52
    %p54 = scmp.ne.s32.totalorder %s43, %s46
    %p55 = scmp.eq.s32.totalorder %s15, 1
    %p56 = por %p54, %p55
    %p57 = scmp.ne.s32.totalorder %s46, %s47
    %p58 = scmp.eq.s32.totalorder %s15, 0
    %p59 = por %p57, %p58
    %p60 = scmp.ne.s32.totalorder %s46, %s47
    %p61 = scmp.eq.s32.totalorder %s16, 1
    %p62 = por %p60, %p61
    %p64 = scmp.ne.s32.totalorder %s47, %s63
    %p65 = scmp.eq.s32.totalorder %s16, 0
    %p66 = por %p64, %p65
    %s67 = sadd.s32 %s18, %s19
    %s68 = sadd.s32 %s32, %s28
    %s69 = ssub.s32 %s17, %s36
    %s70 = ssub.s32 %s67, %s68
    %s71 = sor.u32 %s69, %s70
    %p72 = scmp.eq.s32.totalorder %s71, 0
    %s74 = sadd.s32 %s73, 1
    %s75 = scalar_select %p72, %s73, %s74
    %p78 = pneg %p72
    %p79 = scmp.eq.s32.totalorder %s10, 1
    %p80 = por %p78, %p79
    %p81 = scmp.ne.s32.totalorder %s73, %s76
    %p82 = scmp.eq.s32.totalorder %s10, 0
    %p83 = por %p81, %p82
    %p84 = scmp.ne.s32.totalorder %s73, %s76
    %p85 = scmp.eq.s32.totalorder %s15, 1
    %p86 = por %p84, %p85
    %p87 = scmp.ne.s32.totalorder %s76, %s77
    %p88 = scmp.eq.s32.totalorder %s15, 0
    %p89 = por %p87, %p88
    %p90 = scmp.ne.s32.totalorder %s76, %s77
    %p91 = scmp.eq.s32.totalorder %s16, 1
    %p92 = por %p90, %p91
    %p94 = scmp.ne.s32.totalorder %s77, %s93
    %p95 = scmp.eq.s32.totalorder %s16, 0
    %p96 = por %p94, %p95
    %s97 = ssub.s32 %s17, %s36
    %s98 = ssub.s32 %s18, %s32
    %s99 = sor.u32 %s97, %s98
    %p100 = scmp.eq.s32.totalorder %s99, 0
    %s102 = sadd.s32 %s101, 1
    %s103 = scalar_select %p100, %s101, %s102
    %p106 = pneg %p100
    %p107 = scmp.eq.s32.totalorder %s10, 1
    %p108 = por %p106, %p107
    %p109 = scmp.ne.s32.totalorder %s101, %s104
    %p110 = scmp.eq.s32.totalorder %s10, 0
    %p111 = por %p109, %p110
    %p112 = scmp.ne.s32.totalorder %s101, %s104
    %p113 = scmp.eq.s32.totalorder %s15, 1
    %p114 = por %p112, %p113
    %p115 = scmp.ne.s32.totalorder %s104, %s105
    %p116 = scmp.eq.s32.totalorder %s15, 0
    %p117 = por %p115, %p116
    %p118 = scmp.ne.s32.totalorder %s104, %s105
    %p119 = scmp.eq.s32.totalorder %s16, 1
    %p120 = por %p118, %p119
    %p122 = scmp.ne.s32.totalorder %s105, %s121
    %p123 = scmp.eq.s32.totalorder %s16, 0
    %p124 = por %p122, %p123
    %s125 = ssub.s32 %s17, %s36
    %s126 = ssub.s32 %s18, %s32
    %s127 = sor.u32 %s125, %s126
    %p128 = scmp.eq.s32.totalorder %s127, 0
    %s130 = sadd.s32 %s129, 1
    %s131 = scalar_select %p128, %s129, %s130
    %p134 = pneg %p128
    %p135 = scmp.eq.s32.totalorder %s10, 1
    %p136 = por %p134, %p135
    %p137 = scmp.ne.s32.totalorder %s129, %s132
    %p138 = scmp.eq.s32.totalorder %s10, 0
    %p139 = por %p137, %p138
    %p140 = scmp.ne.s32.totalorder %s129, %s132
    %p141 = scmp.eq.s32.totalorder %s15, 1
    %p142 = por %p140, %p141
    %p143 = scmp.ne.s32.totalorder %s132, %s133
    %p144 = scmp.eq.s32.totalorder %s15, 0
    %p145 = por %p143, %p144
    %p146 = scmp.ne.s32.totalorder %s132, %s133
    %p147 = scmp.eq.s32.totalorder %s16, 1
    %p148 = por %p146, %p147
    %p150 = scmp.ne.s32.totalorder %s133, %s149
    %p151 = scmp.eq.s32.totalorder %s16, 0
    %p152 = por %p150, %p151
    %p153 = scmp.le.s32.totalorder 1, %s10
    %p154 = scmp.lt.s32.totalorder %s10, 3
    %p155 = pnand %p153, %p154
    %p156 = pneg %p155
    // Predicated region
    $region9: #{iou_loss.1} parent=5 // pred_check
      _
    $region10: #{iou_loss.1} parent=5 // pred_check_branch
      %158 = sbr.rel (%p155) target = $region12
    $region11: #{iou_loss.1} parent=5 // pred_region
      %s159 = ssub.s32 %s10, 1
    $region12: #{iou_loss.1} parent=5 // pred_fallthru
      _
    %p160 = scmp.lt.s32.totalorder %s10, 2
    // Predicated region
    $region13: #{iou_loss.1} parent=5 // pred_check
      %p161 = pneg %p160
    $region14: #{iou_loss.1} parent=5 // pred_check_branch
      %163 = sbr.rel (%p161) target = $region16
    $region15: #{iou_loss.1} parent=5 // pred_region
      // Predicated region
      $region17: #{iou_loss.1} parent=15 // pred_check
        %p164 = pneg %p53
      $region18: #{iou_loss.1} parent=15 // pred_check_branch
        %166 = sbr.rel (%p164) target = $region20
      $region19: #{iou_loss.1} parent=15 // pred_region
        %s167 = sadd.s32 %s18, %s19
        %p168 = scmp.lt.s32.totalorder %s17, 1
        %s169 = scalar_select %p168, %s17, 1
        %p170 = scmp.lt.s32.totalorder %s167, 0
        %s171 = scalar_select %p170, %s167, 0
        %s172 = smul.addr %s169, 4
        %s173 = sadd.s32 %s171, %s172
        %s174 = smul.addr %s173, 2
        %s175 = scalar_lea.vmem %s0, %s174
        %s176 = sadd.s32 %s18, %s19
      $region20: #{iou_loss.1} parent=15 // pred_fallthru
        _
      // Predicated region
      $region21: #{iou_loss.1} parent=15 // pred_check
        %p177 = pneg %p83
      $region22: #{iou_loss.1} parent=15 // pred_check_branch
        %179 = sbr.rel (%p177) target = $region24
      $region23: #{iou_loss.1} parent=15 // pred_region
        %s180 = sadd.s32 %s18, %s19
        %p181 = scmp.lt.s32.totalorder %s17, 1
        %s182 = scalar_select %p181, %s17, 1
        %p183 = scmp.lt.s32.totalorder %s180, 0
        %s184 = scalar_select %p183, %s180, 0
        %s185 = sadd.s32 %s184, %s182
        %s186 = smul.addr %s185, 2
        %s187 = scalar_lea.vmem %s1, %s186
        %s188 = sadd.s32 %s18, %s19
      $region24: #{iou_loss.1} parent=15 // pred_fallthru
        _
    $region16: #{iou_loss.1} parent=5 // pred_fallthru
      _
    %p189 = scmp.le.s32.totalorder 1, %s10
    %p190 = scmp.lt.s32.totalorder %s10, 3
    %p191 = pnand %p189, %p190
    %p192 = pneg %p191
    // Predicated region
    $region25: #{iou_loss.1} parent=5 // pred_check
      _
    $region26: #{iou_loss.1} parent=5 // pred_check_branch
      %194 = sbr.rel (%p191) target = $region28
    $region27: #{iou_loss.1} parent=5 // pred_region
      %s195 = ssub.s32 %s10, 1
      %s196 = sadd.s32 %s21, %s22
      %p197 = scmp.lt.s32.totalorder %s20, 1
      %s198 = scalar_select %p197, %s20, 1
      %p199 = scmp.lt.s32.totalorder %s196, 0
      %s200 = scalar_select %p199, %s196, 0
      %s201 = smul.addr %s198, 4
      %s202 = sadd.s32 %s200, %s201
      %s203 = smul.addr %s202, 2
      %s204 = scalar_lea.vmem %s0, %s203
      %p205 = pneg %p59
      %p206 = pneg %p56
      %s207 = sadd.s32 %s21, %s22
      %p208 = scmp.lt.s32.totalorder %s20, 1
      %s209 = scalar_select %p208, %s20, 1
      %p210 = scmp.lt.s32.totalorder %s207, 0
      %s211 = scalar_select %p210, %s207, 0
      %s212 = sadd.s32 %s211, %s209
      %s213 = smul.addr %s212, 2
      %s214 = scalar_lea.vmem %s1, %s213
      %p215 = pneg %p89
      %p216 = pneg %p86
      %p217 = pneg %p117
      %p218 = pneg %p114
      %p219 = scmp.lt.s32.totalorder %s20, 1
      %s220 = scalar_select %p219, %s20, 1
      %p221 = scmp.lt.s32.totalorder %s21, 0
      %s222 = scalar_select %p221, %s21, 0
      %s223 = sadd.s32 %s222, %s220
      %s224 = scalar_lea.vmem %s2, %s223
      %p225 = pneg %p145
      %p226 = pneg %p142
      %p227 = scmp.lt.s32.totalorder %s20, 1
      %s228 = scalar_select %p227, %s20, 1
      %p229 = scmp.lt.s32.totalorder %s21, 0
      %s230 = scalar_select %p229, %s21, 0
      %s231 = sadd.s32 %s230, %s228
      %s232 = scalar_lea.vmem %s3, %s231
      %s233 = sadd.s32 %s21, %s22
      %p234 = scmp.lt.s32.totalorder %s20, 1
      %s235 = scalar_select %p234, %s20, 1
      %p236 = scmp.lt.s32.totalorder %s233, 0
      %s237 = scalar_select %p236, %s233, 0
      %s238 = smul.addr %s235, 4
      %s239 = sadd.s32 %s237, %s238
      %s240 = smul.addr %s239, 2
      %s241 = scalar_lea.vmem %s0, %s240
      %s242 = sadd.s32 %s21, %s22
      %s243 = sadd.s32 %s21, %s22
      %p244 = scmp.lt.s32.totalorder %s20, 1
      %s245 = scalar_select %p244, %s20, 1
      %p246 = scmp.lt.s32.totalorder %s243, 0
      %s247 = scalar_select %p246, %s243, 0
      %s248 = sadd.s32 %s247, %s245
      %s249 = smul.addr %s248, 2
      %s250 = scalar_lea.vmem %s1, %s249
      %s251 = sadd.s32 %s21, %s22
      %p252 = scmp.lt.s32.totalorder %s20, 1
      %s253 = scalar_select %p252, %s20, 1
      %p254 = scmp.lt.s32.totalorder %s21, 0
      %s255 = scalar_select %p254, %s21, 0
      %s256 = sadd.s32 %s255, %s253
      %s257 = scalar_lea.vmem %s2, %s256
      %p258 = scmp.lt.s32.totalorder %s20, 1
      %s259 = scalar_select %p258, %s20, 1
      %p260 = scmp.lt.s32.totalorder %s21, 0
      %s261 = scalar_select %p260, %s21, 0
      %s262 = sadd.s32 %s261, %s259
      %s263 = scalar_lea.vmem %s3, %s262
      %p264 = scmp.eq.s32.totalorder %s22, 0
      // Predicated region
      $region29: #{iou_loss.1} parent=27 // pred_check
        %p265 = pneg %p264
      $region30: #{iou_loss.1} parent=27 // pred_check_branch
        %267 = sbr.rel (%p265) target = $region32
      $region31: #{iou_loss.1} parent=27 // pred_region
        %268 = vst [vmem:[#allocation2] sm:$0x1] 0
        %269 = vst [vmem:[#allocation3] sm:$0x1] 0
      $region32: #{iou_loss.1} parent=27 // pred_fallthru
        _
      %v270 = vld [vmem:[%s250] sm:$0x3]
      %v271 = vld [vmem:[%s241] sm:$0x3]
      %s272 = scalar_lea.vmem %s241, 2
      %v273 = vld [vmem:[%s272] sm:$0x3]
      %vm274 = vcmp.gt.f32.partialorder %v273, %v271
      %v275 = vsel %vm274, %v273, %v271
      %v276 = vsel %vm274, 1, 0
      %s277 = scalar_lea.vmem %s241, 4
      %v278 = vld [vmem:[%s277] sm:$0x3]
      %vm279 = vcmp.gt.f32.partialorder %v278, %v275
      %v280 = vsel %vm279, %v278, %v275
      %v281 = vsel %vm279, 2, %v276
      %s282 = scalar_lea.vmem %s241, 6
      %v283 = vld [vmem:[%s282] sm:$0x3]
      %vm284 = vcmp.gt.f32.partialorder %v283, %v280
      %v285 = vsel %vm284, 3, %v281
      %vm286 = vcmp.ne.s32.totalorder %v270, 4294967295
      %vm287 = vcmp.ne.s32.totalorder %v285, %v270
      %vm288 = vmand %vm286, %vm287
      %v289 = vld [vmem:[#allocation3] sm:$0x1]
      %v290 = vsel %vm286, 1, 0
      %vm291 = vcmask 1041408
      %v292 = vsel %vm291, %v290, 0
      %v293 = vrot.slane %v292, 4
      %v294 = vadd.s32 %v292, %v293
      %v295 = vrot.slane %v294, 2
      %v296 = vadd.s32 %v294, %v295
      %v297 = vrot.slane %v296, 1
      %v298 = vadd.s32 %v296, %v297
      %v299 = vadd.s32 %v289, %v298
      %300 = vst [vmem:[#allocation3] sm:$0x1] %v299
      %v301 = vld [vmem:[#allocation2] sm:$0x1]
      %v302 = vsel %vm288, 1, 0
      %v303 = vsel %vm291, %v302, 0
      %v304 = vrot.slane %v303, 4
      %v305 = vadd.s32 %v303, %v304
      %v306 = vrot.slane %v305, 2
      %v307 = vadd.s32 %v305, %v306
      %v308 = vrot.slane %v307, 1
      %v309 = vadd.s32 %v307, %v308
      %v310 = vadd.s32 %v301, %v309
      %311 = vst [vmem:[#allocation2] sm:$0x1] %v310
      // Predicated region
      $region33: #{iou_loss.1} parent=27 // pred_check
        %p312 = pneg %p264
      $region34: #{iou_loss.1} parent=27 // pred_check_branch
        %314 = sbr.rel (%p312) target = $region36
      $region35: #{iou_loss.1} parent=27 // pred_region
        %v315 = vld [vmem:[#allocation2] sm:$0x1]
        %316 = vst [vmem:[%s257] sm:$0x1] %v315
        %v317 = vld [vmem:[#allocation3] sm:$0x1]
        %318 = vst [vmem:[%s263] sm:$0x1] %v317
      $region36: #{iou_loss.1} parent=27 // pred_fallthru
        _
      %p319 = scmp.lt.s32.totalorder %s20, 1
      %s320 = scalar_select %p319, %s20, 1
      %p321 = scmp.lt.s32.totalorder %s21, 0
      %s322 = scalar_select %p321, %s21, 0
      %s323 = sadd.s32 %s322, %s320
      %s324 = scalar_lea.vmem %s2, %s323
      %p325 = scmp.lt.s32.totalorder %s20, 1
      %s326 = scalar_select %p325, %s20, 1
      %p327 = scmp.lt.s32.totalorder %s21, 0
      %s328 = scalar_select %p327, %s21, 0
      %s329 = sadd.s32 %s328, %s326
      %s330 = scalar_lea.vmem %s3, %s329
      // Predicated region
      $region37: #{iou_loss.1} parent=27 // pred_check
        %p331 = pneg %p114
      $region38: #{iou_loss.1} parent=27 // pred_check_branch
        %333 = sbr.rel (%p331) target = $region40
      $region39: #{iou_loss.1} parent=27 // pred_region
        _
      $region40: #{iou_loss.1} parent=27 // pred_fallthru
        _
      // Predicated region
      $region41: #{iou_loss.1} parent=27 // pred_check
        %p334 = pneg %p142
      $region42: #{iou_loss.1} parent=27 // pred_check_branch
        %336 = sbr.rel (%p334) target = $region44
      $region43: #{iou_loss.1} parent=27 // pred_region
        _
      $region44: #{iou_loss.1} parent=27 // pred_fallthru
        _
    $region28: #{iou_loss.1} parent=5 // pred_fallthru
      _
    %p337 = scmp.le.s32.totalorder 2, %s10
    // Predicated region
    $region45: #{iou_loss.1} parent=5 // pred_check
      %p338 = pneg %p337
    $region46: #{iou_loss.1} parent=5 // pred_check_branch
      %340 = sbr.rel (%p338) target = $region48
    $region47: #{iou_loss.1} parent=5 // pred_region
      %s341 = ssub.s32 %s10, 2
      // Predicated region
      $region49: #{iou_loss.1} parent=47 // pred_check
        %p342 = pneg %p120
      $region50: #{iou_loss.1} parent=47 // pred_check_branch
        %344 = sbr.rel (%p342) target = $region52
      $region51: #{iou_loss.1} parent=47 // pred_region
        %p345 = scmp.lt.s32.totalorder %s23, 1
        %s346 = scalar_select %p345, %s23, 1
        %p347 = scmp.lt.s32.totalorder %s24, 0
        %s348 = scalar_select %p347, %s24, 0
        %s349 = sadd.s32 %s348, %s346
        %s350 = scalar_lea.vmem %s2, %s349
      $region52: #{iou_loss.1} parent=47 // pred_fallthru
        _
      // Predicated region
      $region53: #{iou_loss.1} parent=47 // pred_check
        %p351 = pneg %p148
      $region54: #{iou_loss.1} parent=47 // pred_check_branch
        %353 = sbr.rel (%p351) target = $region56
      $region55: #{iou_loss.1} parent=47 // pred_region
        %p354 = scmp.lt.s32.totalorder %s23, 1
        %s355 = scalar_select %p354, %s23, 1
        %p356 = scmp.lt.s32.totalorder %s24, 0
        %s357 = scalar_select %p356, %s24, 0
        %s358 = sadd.s32 %s357, %s355
        %s359 = scalar_lea.vmem %s3, %s358
      $region56: #{iou_loss.1} parent=47 // pred_fallthru
        _
    $region48: #{iou_loss.1} parent=5 // pred_fallthru
      _
  $region6: #{iou_loss.1} parent=0 // loop_footer
    %s14 = sadd.s32 1, %s10
  $region7: #{iou_loss.1} parent=0 // loop_footer_branch
    %9 = sbr.rel target = $region3
  $region8: #{iou_loss.1} parent=0 // loop_exit
    _

</llo_original>
